<compile_context>
chip_gen: v6e
topology: v6e:2x2x1
jax: 0.10.0
libtpu: 0.0.40
codegen_flags: <defaults>
</compile_context>

<pallas_src>
import functools

import jax
import jax.numpy as jnp
from jax import lax
from jax.experimental import pallas as pl
from jax.experimental.pallas import tpu as pltpu


def _round_up(n, m):
    return -(-n // m) * m


def _block_kernel(*refs, K, dilation, T, has_down, has_prev):
    """Fused TemporalBlock for one (L-tile, batch) grid cell; all in VMEM."""
    i = 0
    if has_prev:
        xc_ref, xp_ref = refs[0], refs[1]
        i = 2
    else:
        xin_ref = refs[0]
        i = 1
    w1_ref, b1_ref, w2_ref, b2_ref = refs[i:i + 4]
    i += 4
    if has_down:
        wd_ref, bd_ref = refs[i], refs[i + 1]
        i += 2
    o_ref = refs[i]

    j = pl.program_id(0)                 # L-tile index
    h1 = (K - 1) * dilation              # one conv's causal halo
    H = 2 * h1                           # fused (conv1 o conv2) halo
    n1 = T + h1                          # conv1 outputs needed by this tile

    if has_prev:
        # Halo taken from the previous L tile: full-tile, lane-aligned concat
        # (T is a multiple of 128 in this path).  Tile 0's halo is zero.
        x_cur = xc_ref[0]                                     # (C_in, T)
        x_prev = jnp.where(j > 0, xp_ref[0], jnp.zeros_like(xp_ref[0]))
        xw = jnp.concatenate([x_prev, x_cur], axis=-1)        # (C_in, 2T)
        base = T - H
    else:
        # Single L tile: the causal zero halo was baked into the input block.
        xw = xin_ref[0]                                       # (C_in, H + T)
        x_cur = xw[:, H:]                                     # (C_in, T)
        base = 0

    # ---- conv1: stack the K dilated taps along channels (im2col, channel
    # counts are sublane-aligned) -> one deep MXU matmul, f32 accumulate.
    cat1 = jnp.concatenate(
        [xw[:, base + k * dilation: base + k * dilation + n1] for k in range(K)],
        axis=0)                                               # (K*C_in, n1)
    out1 = jnp.dot(w1_ref[...], cat1, preferred_element_type=jnp.float32)
    out1 = jnp.maximum(out1 + b1_ref[...], 0.0)
    # conv2 is causally zero-padded in the reference: out1 at absolute
    # positions < 0 must contribute zeros, not relu(bias).
    col = lax.broadcasted_iota(jnp.int32, (1, n1), 1)
    out1 = jnp.where(j * T - h1 + col >= 0, out1, 0.0)
    # TODO(synk): dropout1 / dropout2 are inference-mode identity.
    out1 = out1.astype(w2_ref.dtype)

    # ---- conv2 (same im2col trick) over this tile's T output positions.
    cat2 = jnp.concatenate(
        [out1[:, k * dilation: k * dilation + T] for k in range(K)],
        axis=0)                                               # (K*C_out, T)
    out2 = jnp.dot(w2_ref[...], cat2, preferred_element_type=jnp.float32)
    out2 = jnp.maximum(out2 + b2_ref[...], 0.0)

    # ---- residual branch (identity or fused 1x1 downsample) + final ReLU,
    # all in f32, cast on store.  Bias adds are (C,1) broadcasts: minor cost.
    if has_down:
        res = jnp.dot(wd_ref[...], x_cur, preferred_element_type=jnp.float32)
        res = res + bd_ref[...]
    else:
        res = x_cur.astype(jnp.float32)
    o_ref[0] = jnp.maximum(out2 + res, 0.0).astype(o_ref.dtype)


def _choose_l_tile(L, halo, c_in, c_out, itemsize):
    """Length-tile size: full L when small, otherwise the largest 128-multiple
    divisor of L whose double-buffered pipeline blocks + in-kernel temporaries
    stay well inside the 64 MiB VMEM of v7x (and 128 MiB of v5e/v6e)."""
    # Rough per-length-column bytes: 2x double-buffered (x_cur, x_prev, out)
    # blocks plus window / im2col stacks / f32 intermediates.
    per_col = 4 * (2 * c_in + c_out) * itemsize + (4 * c_in + 8 * c_out) * 4
    max_t = max(halo, (20 * 2 ** 20) // max(per_col, 1))
    if L <= max_t:
        return L
    best = None
    t = 128
    while t <= max_t:
        if L % t == 0 and t >= halo:
            best = t
        t += 128
    return best if best is not None else L


def temporal_block(x, layer, dilation):
    """One fused TemporalBlock: x (B, C_in_p, L) -> (B, C_out_p, L).

    Channel counts are already padded to multiples of 8 by the caller; padded
    channels are exactly zero on input and remain zero on output.
    """
    B, C_in_p, L = x.shape
    w1, b1, w2, b2 = layer["w1"], layer["b1"], layer["w2"], layer["b2"]
    K, C_out, C_in = w1.shape
    has_down = layer["wd"] is not None
    C_out_p = _round_up(C_out, 8)

    # Fold the K taps into the contraction dim and zero-pad channel dims to
    # the sublane-aligned sizes (cheap, weight-sized trace-time ops).
    w1p = jnp.pad(w1, ((0, 0), (0, C_out_p - C_out), (0, C_in_p - C_in)))
    w2p = jnp.pad(w2, ((0, 0), (0, C_out_p - C_out), (0, C_out_p - C_out)))
    w1_f = jnp.transpose(w1p, (1, 0, 2)).reshape(C_out_p, K * C_in_p).astype(x.dtype)
    w2_f = jnp.transpose(w2p, (1, 0, 2)).reshape(C_out_p, K * C_out_p).astype(x.dtype)
    # Biases are consumed in f32 inside the kernel; cast once here.
    b1_c = jnp.pad(b1, (0, C_out_p - C_out)).reshape(C_out_p, 1).astype(jnp.float32)
    b2_c = jnp.pad(b2, (0, C_out_p - C_out)).reshape(C_out_p, 1).astype(jnp.float32)

    h1 = (K - 1) * dilation
    H = 2 * h1                                   # fused receptive-field halo
    itemsize = x.dtype.itemsize
    T = _choose_l_tile(L, H, C_in_p, C_out_p, itemsize)
    n_t = pl.cdiv(L, T)
    has_prev = n_t > 1

    if has_prev:
        # Halo read from the previous tile: two BlockSpecs on the same input,
        # no wrapper-side padding of the activation.
        in_specs = [
            pl.BlockSpec((1, C_in_p, T), lambda j, b: (b, 0, j)),
            pl.BlockSpec((1, C_in_p, T),
                         lambda j, b: (b, 0, jnp.maximum(j - 1, 0))),
        ]
        args = [x, x]
    else:
        # Single tile over L: bake the causal zero halo into the block once.
        x_in = jnp.pad(x, ((0, 0), (0, 0), (H, 0))) if H > 0 else x
        in_specs = [pl.BlockSpec((1, C_in_p, L + H), lambda j, b: (b, 0, 0))]
        args = [x_in]

    in_specs += [
        pl.BlockSpec((C_out_p, K * C_in_p), lambda j, b: (0, 0)),
        pl.BlockSpec((C_out_p, 1), lambda j, b: (0, 0)),
        pl.BlockSpec((C_out_p, K * C_out_p), lambda j, b: (0, 0)),
        pl.BlockSpec((C_out_p, 1), lambda j, b: (0, 0)),
    ]
    args += [w1_f, b1_c, w2_f, b2_c]
    if has_down:
        wd_f = jnp.pad(layer["wd"],
                       ((0, 0), (0, C_out_p - C_out), (0, C_in_p - C_in))
                       ).reshape(C_out_p, C_in_p).astype(x.dtype)
        bd_c = jnp.pad(layer["bd"], (0, C_out_p - C_out)
                       ).reshape(C_out_p, 1).astype(jnp.float32)
        in_specs += [pl.BlockSpec((C_out_p, C_in_p), lambda j, b: (0, 0)),
                     pl.BlockSpec((C_out_p, 1), lambda j, b: (0, 0))]
        args += [wd_f, bd_c]

    flops = 2 * B * L * C_out_p * (
        K * C_in_p + K * C_out_p + (C_in_p if has_down else 0))
    bytes_accessed = (
        B * C_in_p * L * itemsize * (2 if has_prev else 1)     # activations in
        + B * C_out_p * L * itemsize                           # activations out
        + (w1_f.size + w2_f.size) * itemsize + 2 * C_out_p * 4
        + ((C_out_p * C_in_p) * itemsize + C_out_p * 4 if has_down else 0))

    kern = functools.partial(_block_kernel, K=K, dilation=dilation, T=T,
                             has_down=has_down, has_prev=has_prev)

    return pl.pallas_call(
        kern,
        out_shape=jax.ShapeDtypeStruct((B, C_out_p, L), x.dtype),
        grid_spec=pltpu.PrefetchScalarGridSpec(
            num_scalar_prefetch=0,
            grid=(n_t, B),                   # L tiles leading -> megacore split
            in_specs=in_specs,
            out_specs=pl.BlockSpec((1, C_out_p, T), lambda j, b: (b, 0, j)),
        ),
        compiler_params=pltpu.CompilerParams(
            dimension_semantics=("parallel", "parallel"),
            vmem_limit_bytes=48 * 1024 * 1024),
        cost_estimate=pl.CostEstimate(flops=int(flops), transcendentals=0,
                                      bytes_accessed=int(bytes_accessed)),
    )(*args)


def init_tcn_params(key, num_inputs, num_channels, kernel_size):
    """Deterministic init mirroring TemporalBlock.init_weights (normal(0, 0.01))."""
    params = []
    for i, c_out in enumerate(num_channels):
        c_in = num_inputs if i == 0 else num_channels[i - 1]
        key, k1, k2, k3, k4, k5, k6 = jax.random.split(key, 7)
        layer = {
            "w1": 0.01 * jax.random.normal(k1, (kernel_size, c_out, c_in), jnp.float32),
            "b1": 0.01 * jax.random.normal(k2, (c_out,), jnp.float32),
            "w2": 0.01 * jax.random.normal(k3, (kernel_size, c_out, c_out), jnp.float32),
            "b2": 0.01 * jax.random.normal(k4, (c_out,), jnp.float32),
            "wd": None,
            "bd": None,
        }
        if c_in != c_out:   # downsample 1x1 conv
            layer["wd"] = 0.01 * jax.random.normal(k5, (1, c_out, c_in), jnp.float32)
            layer["bd"] = 0.01 * jax.random.normal(k6, (c_out,), jnp.float32)
        params.append(layer)
    return params


def tcn_forward(x, params):
    """TemporalConvNet.forward: (B, num_inputs, L) -> (B, num_channels[-1], L)."""
    c0 = x.shape[1]
    c0_p = _round_up(c0, 8)
    if c0_p != c0:          # pad channels to the sublane tile once, up front
        x = jnp.pad(x, ((0, 0), (0, c0_p - c0), (0, 0)))
    for i, layer in enumerate(params):
        x = temporal_block(x, layer, 2 ** i)
    c_last = params[-1]["w1"].shape[1]
    return x[:, :c_last, :]


# ---------------- pure-JAX reference (correctness check only) ----------------
def _ref_conv(x, w, b, dilation):
    K = w.shape[0]
    pad = (K - 1) * dilation
    w_oik = jnp.transpose(w, (1, 2, 0))              # (C_out, C_in, K)
    y = lax.conv_general_dilated(x, w_oik, window_strides=(1,),
                                 padding=[(pad, 0)], rhs_dilation=(dilation,),
                                 dimension_numbers=("NCH", "OIH", "NCH"))
    return y + b[None, :, None]


def _ref_forward(x, params):
    for i, p in enumerate(params):
        d = 2 ** i
        out = jnp.maximum(_ref_conv(x, p["w1"], p["b1"], d), 0.0)
        out = jnp.maximum(_ref_conv(out, p["w2"], p["b2"], d), 0.0)
        res = x if p["wd"] is None else _ref_conv(x, p["wd"], p["bd"], 1)
        x = jnp.maximum(out + res, 0.0)
    return x


if __name__ == "__main__":
    key = jax.random.PRNGKey(0)
    kx, kp = jax.random.split(key)

    B, num_inputs, L = 2, 4, 16
    num_channels = [8, 8]          # two TemporalBlocks, dilations 1 and 2
    kernel_size = 2

    x = jax.random.normal(kx, (B, num_inputs, L), jnp.float32)
    params = init_tcn_params(kp, num_inputs, num_channels, kernel_size)

    tcn = jax.jit(tcn_forward)     # fuse the (tiny) per-layer weight prep
    out = jax.block_until_ready(tcn(x, params))
    ref = _ref_forward(x, params)

    assert out.shape == (B, num_channels[-1], L)
    assert jnp.allclose(out, ref, atol=1e-5, rtol=1e-5), "mismatch vs reference"

    print("KERNEL_OK")
</pallas_src>

<mosaic_0001>
module attributes {stable_mosaic.version = 11 : i64} {
  func.func @_block_kernel(%arg0: i32, %arg1: i32, %arg2: memref<1x8x20xf32, #tpu.memory_space<vmem>>, %arg3: memref<8x16xf32, #tpu.memory_space<vmem>>, %arg4: memref<8x1xf32, #tpu.memory_space<vmem>>, %arg5: memref<8x16xf32, #tpu.memory_space<vmem>>, %arg6: memref<8x1xf32, #tpu.memory_space<vmem>>, %arg7: memref<1x8x16xf32, #tpu.memory_space<vmem>>) attributes {dimension_semantics = [#tpu.dimension_semantics<parallel>, #tpu.dimension_semantics<parallel>], iteration_bounds = array<i64: 1, 2>, scalar_prefetch = 0 : i64, scratch_operands = 0 : i64, tpu.core_type = #tpu.core_type<tc>, window_params = [{transform_indices = @transform_0, window_bounds = array<i64: 1, 8, 20>}, {pipeline_mode = #tpu.pipeline_mode<synchronous>, transform_indices = @transform_1, window_bounds = array<i64: 8, 16>}, {pipeline_mode = #tpu.pipeline_mode<synchronous>, transform_indices = @transform_2, window_bounds = array<i64: 8, 1>}, {pipeline_mode = #tpu.pipeline_mode<synchronous>, transform_indices = @transform_3, window_bounds = array<i64: 8, 16>}, {pipeline_mode = #tpu.pipeline_mode<synchronous>, transform_indices = @transform_4, window_bounds = array<i64: 8, 1>}, {transform_indices = @transform_5, window_bounds = array<i64: 1, 8, 16>}]} {
    %c0 = arith.constant 0 : index
    %c0_0 = arith.constant 0 : index
    %c0_1 = arith.constant 0 : index
    %0 = vector.load %arg2[%c0, %c0_0, %c0_1] : memref<1x8x20xf32, #tpu.memory_space<vmem>>, vector<1x8x20xf32>
    %1 = vector.shape_cast %0 : vector<1x8x20xf32> to vector<8x20xf32>
    %2 = vector.extract_strided_slice %1 {offsets = [0, 4], sizes = [8, 16], strides = [1, 1]} : vector<8x20xf32> to vector<8x16xf32>
    %3 = vector.extract_strided_slice %1 {offsets = [0, 0], sizes = [8, 18], strides = [1, 1]} : vector<8x20xf32> to vector<8x18xf32>
    %4 = vector.extract_strided_slice %1 {offsets = [0, 2], sizes = [8, 18], strides = [1, 1]} : vector<8x20xf32> to vector<8x18xf32>
    %5 = tpu.concatenate %3, %4 in 0 : vector<8x18xf32>, vector<8x18xf32> -> vector<16x18xf32>
    %c0_2 = arith.constant 0 : index
    %c0_3 = arith.constant 0 : index
    %6 = vector.load %arg3[%c0_2, %c0_3] : memref<8x16xf32, #tpu.memory_space<vmem>>, vector<8x16xf32>
    %cst = arith.constant dense<0.000000e+00> : vector<8x18xf32>
    %7 = tpu.matmul %6, %5, %cst {dimension_numbers = #tpu.dot_dimension_numbers<[1], [0], [0], [1], [0, 0, 1, 1], [], []>} : vector<8x16xf32>, vector<16x18xf32>, vector<8x18xf32> -> vector<8x18xf32>
    %c0_4 = arith.constant 0 : index
    %c0_5 = arith.constant 0 : index
    %8 = vector.load %arg4[%c0_4, %c0_5] : memref<8x1xf32, #tpu.memory_space<vmem>>, vector<8x1xf32>
    %9 = vector.broadcast %8 : vector<8x1xf32> to vector<8x18xf32>
    %10 = arith.addf %7, %9 : vector<8x18xf32>
    %cst_6 = arith.constant 0.000000e+00 : f32
    %11 = vector.broadcast %cst_6 : f32 to vector<8x18xf32>
    %12 = arith.maximumf %10, %11 : vector<8x18xf32>
    %13 = tpu.iota {dimensions = array<i32: 1>} : vector<1x18xi32>
    %c16_i32 = arith.constant 16 : i32
    %14 = arith.muli %arg0, %c16_i32 : i32
    %c2_i32 = arith.constant 2 : i32
    %15 = arith.subi %14, %c2_i32 : i32
    %16 = vector.broadcast %15 : i32 to vector<1x18xi32>
    %17 = arith.addi %16, %13 : vector<1x18xi32>
    %c0_i32 = arith.constant 0 : i32
    %18 = vector.broadcast %c0_i32 : i32 to vector<1x18xi32>
    %19 = arith.cmpi sge, %17, %18 : vector<1x18xi32>
    %cst_7 = arith.constant 0.000000e+00 : f32
    %20 = vector.shape_cast %19 : vector<1x18xi1> to vector<1x18xi1>
    %21 = vector.broadcast %20 : vector<1x18xi1> to vector<8x18xi1>
    %22 = vector.broadcast %cst_7 : f32 to vector<8x18xf32>
    %23 = arith.select %21, %12, %22 : vector<8x18xi1>, vector<8x18xf32>
    %24 = vector.extract_strided_slice %23 {offsets = [0, 0], sizes = [8, 16], strides = [1, 1]} : vector<8x18xf32> to vector<8x16xf32>
    %25 = vector.extract_strided_slice %23 {offsets = [0, 2], sizes = [8, 16], strides = [1, 1]} : vector<8x18xf32> to vector<8x16xf32>
    %26 = tpu.concatenate %24, %25 in 0 : vector<8x16xf32>, vector<8x16xf32> -> vector<16x16xf32>
    %c0_8 = arith.constant 0 : index
    %c0_9 = arith.constant 0 : index
    %27 = vector.load %arg5[%c0_8, %c0_9] : memref<8x16xf32, #tpu.memory_space<vmem>>, vector<8x16xf32>
    %cst_10 = arith.constant dense<0.000000e+00> : vector<8x16xf32>
    %28 = tpu.matmul %27, %26, %cst_10 {dimension_numbers = #tpu.dot_dimension_numbers<[1], [0], [0], [1], [0, 0, 1, 1], [], []>} : vector<8x16xf32>, vector<16x16xf32>, vector<8x16xf32> -> vector<8x16xf32>
    %c0_11 = arith.constant 0 : index
    %c0_12 = arith.constant 0 : index
    %29 = vector.load %arg6[%c0_11, %c0_12] : memref<8x1xf32, #tpu.memory_space<vmem>>, vector<8x1xf32>
    %30 = vector.broadcast %29 : vector<8x1xf32> to vector<8x16xf32>
    %31 = arith.addf %28, %30 : vector<8x16xf32>
    %cst_13 = arith.constant 0.000000e+00 : f32
    %32 = vector.broadcast %cst_13 : f32 to vector<8x16xf32>
    %33 = arith.maximumf %31, %32 : vector<8x16xf32>
    %34 = arith.addf %33, %2 : vector<8x16xf32>
    %cst_14 = arith.constant 0.000000e+00 : f32
    %35 = vector.broadcast %cst_14 : f32 to vector<8x16xf32>
    %36 = arith.maximumf %34, %35 : vector<8x16xf32>
    %c0_15 = arith.constant 0 : index
    %c0_16 = arith.constant 0 : index
    %c0_17 = arith.constant 0 : index
    %37 = vector.load %arg7[%c0_15, %c0_16, %c0_17] : memref<1x8x16xf32, #tpu.memory_space<vmem>>, vector<1x8x16xf32>
    %38 = vector.shape_cast %37 : vector<1x8x16xf32> to vector<8x16xf32>
    %39 = vector.shape_cast %36 : vector<8x16xf32> to vector<1x8x16xf32>
    tpu.vector_store %arg7[%c0_15, %c0_16, %c0_17], %39 {strides = array<i32>} : memref<1x8x16xf32, #tpu.memory_space<vmem>>, vector<1x8x16xf32>,
    return
  }
  func.func @transform_0(%arg0: i32, %arg1: i32) -> (i32, i32, i32) {
    %c0_i32 = arith.constant 0 : i32
    %c0_i32_0 = arith.constant 0 : i32
    %c0_i32_1 = arith.constant 0 : i32
    return %arg1, %c0_i32, %c0_i32_0 : i32, i32, i32
  }
  func.func @transform_1(%arg0: i32, %arg1: i32) -> (i32, i32) {
    %c0_i32 = arith.constant 0 : i32
    %c0_i32_0 = arith.constant 0 : i32
    %c0_i32_1 = arith.constant 0 : i32
    return %c0_i32, %c0_i32_0 : i32, i32
  }
  func.func @transform_2(%arg0: i32, %arg1: i32) -> (i32, i32) {
    %c0_i32 = arith.constant 0 : i32
    %c0_i32_0 = arith.constant 0 : i32
    %c0_i32_1 = arith.constant 0 : i32
    return %c0_i32, %c0_i32_0 : i32, i32
  }
  func.func @transform_3(%arg0: i32, %arg1: i32) -> (i32, i32) {
    %c0_i32 = arith.constant 0 : i32
    %c0_i32_0 = arith.constant 0 : i32
    %c0_i32_1 = arith.constant 0 : i32
    return %c0_i32, %c0_i32_0 : i32, i32
  }
  func.func @transform_4(%arg0: i32, %arg1: i32) -> (i32, i32) {
    %c0_i32 = arith.constant 0 : i32
    %c0_i32_0 = arith.constant 0 : i32
    %c0_i32_1 = arith.constant 0 : i32
    return %c0_i32, %c0_i32_0 : i32, i32
  }
  func.func @transform_5(%arg0: i32, %arg1: i32) -> (i32, i32, i32) {
    %c0_i32 = arith.constant 0 : i32
    %c0_i32_0 = arith.constant 0 : i32
    return %arg1, %c0_i32, %arg0 : i32, i32, i32
  }
}

module attributes {stable_mosaic.version = 11 : i64} {
  func.func @_block_kernel(%arg0: i32, %arg1: i32, %arg2: memref<1x8x18xf32, #tpu.memory_space<vmem>>, %arg3: memref<8x16xf32, #tpu.memory_space<vmem>>, %arg4: memref<8x1xf32, #tpu.memory_space<vmem>>, %arg5: memref<8x16xf32, #tpu.memory_space<vmem>>, %arg6: memref<8x1xf32, #tpu.memory_space<vmem>>, %arg7: memref<8x8xf32, #tpu.memory_space<vmem>>, %arg8: memref<8x1xf32, #tpu.memory_space<vmem>>, %arg9: memref<1x8x16xf32, #tpu.memory_space<vmem>>) attributes {dimension_semantics = [#tpu.dimension_semantics<parallel>, #tpu.dimension_semantics<parallel>], iteration_bounds = array<i64: 1, 2>, scalar_prefetch = 0 : i64, scratch_operands = 0 : i64, tpu.core_type = #tpu.core_type<tc>, window_params = [{transform_indices = @transform_0, window_bounds = array<i64: 1, 8, 18>}, {pipeline_mode = #tpu.pipeline_mode<synchronous>, transform_indices = @transform_1, window_bounds = array<i64: 8, 16>}, {pipeline_mode = #tpu.pipeline_mode<synchronous>, transform_indices = @transform_2, window_bounds = array<i64: 8, 1>}, {pipeline_mode = #tpu.pipeline_mode<synchronous>, transform_indices = @transform_3, window_bounds = array<i64: 8, 16>}, {pipeline_mode = #tpu.pipeline_mode<synchronous>, transform_indices = @transform_4, window_bounds = array<i64: 8, 1>}, {pipeline_mode = #tpu.pipeline_mode<synchronous>, transform_indices = @transform_5, window_bounds = array<i64: 8, 8>}, {pipeline_mode = #tpu.pipeline_mode<synchronous>, transform_indices = @transform_6, window_bounds = array<i64: 8, 1>}, {transform_indices = @transform_7, window_bounds = array<i64: 1, 8, 16>}]} {
    %c0 = arith.constant 0 : index
    %c0_0 = arith.constant 0 : index
    %c0_1 = arith.constant 0 : index
    %0 = vector.load %arg2[%c0, %c0_0, %c0_1] : memref<1x8x18xf32, #tpu.memory_space<vmem>>, vector<1x8x18xf32>
    %1 = vector.shape_cast %0 : vector<1x8x18xf32> to vector<8x18xf32>
    %2 = vector.extract_strided_slice %1 {offsets = [0, 2], sizes = [8, 16], strides = [1, 1]} : vector<8x18xf32> to vector<8x16xf32>
    %3 = vector.extract_strided_slice %1 {offsets = [0, 0], sizes = [8, 17], strides = [1, 1]} : vector<8x18xf32> to vector<8x17xf32>
    %4 = vector.extract_strided_slice %1 {offsets = [0, 1], sizes = [8, 17], strides = [1, 1]} : vector<8x18xf32> to vector<8x17xf32>
    %5 = tpu.concatenate %3, %4 in 0 : vector<8x17xf32>, vector<8x17xf32> -> vector<16x17xf32>
    %c0_2 = arith.constant 0 : index
    %c0_3 = arith.constant 0 : index
    %6 = vector.load %arg3[%c0_2, %c0_3] : memref<8x16xf32, #tpu.memory_space<vmem>>, vector<8x16xf32>
    %cst = arith.constant dense<0.000000e+00> : vector<8x17xf32>
    %7 = tpu.matmul %6, %5, %cst {dimension_numbers = #tpu.dot_dimension_numbers<[1], [0], [0], [1], [0, 0, 1, 1], [], []>} : vector<8x16xf32>, vector<16x17xf32>, vector<8x17xf32> -> vector<8x17xf32>
    %c0_4 = arith.constant 0 : index
    %c0_5 = arith.constant 0 : index
    %8 = vector.load %arg4[%c0_4, %c0_5] : memref<8x1xf32, #tpu.memory_space<vmem>>, vector<8x1xf32>
    %9 = vector.broadcast %8 : vector<8x1xf32> to vector<8x17xf32>
    %10 = arith.addf %7, %9 : vector<8x17xf32>
    %cst_6 = arith.constant 0.000000e+00 : f32
    %11 = vector.broadcast %cst_6 : f32 to vector<8x17xf32>
    %12 = arith.maximumf %10, %11 : vector<8x17xf32>
    %13 = tpu.iota {dimensions = array<i32: 1>} : vector<1x17xi32>
    %c16_i32 = arith.constant 16 : i32
    %14 = arith.muli %arg0, %c16_i32 : i32
    %c1_i32 = arith.constant 1 : i32
    %15 = arith.subi %14, %c1_i32 : i32
    %16 = vector.broadcast %15 : i32 to vector<1x17xi32>
    %17 = arith.addi %16, %13 : vector<1x17xi32>
    %c0_i32 = arith.constant 0 : i32
    %18 = vector.broadcast %c0_i32 : i32 to vector<1x17xi32>
    %19 = arith.cmpi sge, %17, %18 : vector<1x17xi32>
    %cst_7 = arith.constant 0.000000e+00 : f32
    %20 = vector.shape_cast %19 : vector<1x17xi1> to vector<1x17xi1>
    %21 = vector.broadcast %20 : vector<1x17xi1> to vector<8x17xi1>
    %22 = vector.broadcast %cst_7 : f32 to vector<8x17xf32>
    %23 = arith.select %21, %12, %22 : vector<8x17xi1>, vector<8x17xf32>
    %24 = vector.extract_strided_slice %23 {offsets = [0, 0], sizes = [8, 16], strides = [1, 1]} : vector<8x17xf32> to vector<8x16xf32>
    %25 = vector.extract_strided_slice %23 {offsets = [0, 1], sizes = [8, 16], strides = [1, 1]} : vector<8x17xf32> to vector<8x16xf32>
    %26 = tpu.concatenate %24, %25 in 0 : vector<8x16xf32>, vector<8x16xf32> -> vector<16x16xf32>
    %c0_8 = arith.constant 0 : index
    %c0_9 = arith.constant 0 : index
    %27 = vector.load %arg5[%c0_8, %c0_9] : memref<8x16xf32, #tpu.memory_space<vmem>>, vector<8x16xf32>
    %cst_10 = arith.constant dense<0.000000e+00> : vector<8x16xf32>
    %28 = tpu.matmul %27, %26, %cst_10 {dimension_numbers = #tpu.dot_dimension_numbers<[1], [0], [0], [1], [0, 0, 1, 1], [], []>} : vector<8x16xf32>, vector<16x16xf32>, vector<8x16xf32> -> vector<8x16xf32>
    %c0_11 = arith.constant 0 : index
    %c0_12 = arith.constant 0 : index
    %29 = vector.load %arg6[%c0_11, %c0_12] : memref<8x1xf32, #tpu.memory_space<vmem>>, vector<8x1xf32>
    %30 = vector.broadcast %29 : vector<8x1xf32> to vector<8x16xf32>
    %31 = arith.addf %28, %30 : vector<8x16xf32>
    %cst_13 = arith.constant 0.000000e+00 : f32
    %32 = vector.broadcast %cst_13 : f32 to vector<8x16xf32>
    %33 = arith.maximumf %31, %32 : vector<8x16xf32>
    %c0_14 = arith.constant 0 : index
    %c0_15 = arith.constant 0 : index
    %34 = vector.load %arg7[%c0_14, %c0_15] : memref<8x8xf32, #tpu.memory_space<vmem>>, vector<8x8xf32>
    %cst_16 = arith.constant dense<0.000000e+00> : vector<8x16xf32>
    %35 = tpu.matmul %34, %2, %cst_16 {dimension_numbers = #tpu.dot_dimension_numbers<[1], [0], [0], [1], [0, 0, 1, 1], [], []>} : vector<8x8xf32>, vector<8x16xf32>, vector<8x16xf32> -> vector<8x16xf32>
    %c0_17 = arith.constant 0 : index
    %c0_18 = arith.constant 0 : index
    %36 = vector.load %arg8[%c0_17, %c0_18] : memref<8x1xf32, #tpu.memory_space<vmem>>, vector<8x1xf32>
    %37 = vector.broadcast %36 : vector<8x1xf32> to vector<8x16xf32>
    %38 = arith.addf %35, %37 : vector<8x16xf32>
    %39 = arith.addf %33, %38 : vector<8x16xf32>
    %cst_19 = arith.constant 0.000000e+00 : f32
    %40 = vector.broadcast %cst_19 : f32 to vector<8x16xf32>
    %41 = arith.maximumf %39, %40 : vector<8x16xf32>
    %c0_20 = arith.constant 0 : index
    %c0_21 = arith.constant 0 : index
    %c0_22 = arith.constant 0 : index
    %42 = vector.load %arg9[%c0_20, %c0_21, %c0_22] : memref<1x8x16xf32, #tpu.memory_space<vmem>>, vector<1x8x16xf32>
    %43 = vector.shape_cast %42 : vector<1x8x16xf32> to vector<8x16xf32>
    %44 = vector.shape_cast %41 : vector<8x16xf32> to vector<1x8x16xf32>
    tpu.vector_store %arg9[%c0_20, %c0_21, %c0_22], %44 {strides = array<i32>} : memref<1x8x16xf32, #tpu.memory_space<vmem>>, vector<1x8x16xf32>,
    return
  }
  func.func @transform_0(%arg0: i32, %arg1: i32) -> (i32, i32, i32) {
    %c0_i32 = arith.constant 0 : i32
    %c0_i32_0 = arith.constant 0 : i32
    %c0_i32_1 = arith.constant 0 : i32
    return %arg1, %c0_i32, %c0_i32_0 : i32, i32, i32
  }
  func.func @transform_1(%arg0: i32, %arg1: i32) -> (i32, i32) {
    %c0_i32 = arith.constant 0 : i32
    %c0_i32_0 = arith.constant 0 : i32
    %c0_i32_1 = arith.constant 0 : i32
    return %c0_i32, %c0_i32_0 : i32, i32
  }
  func.func @transform_2(%arg0: i32, %arg1: i32) -> (i32, i32) {
    %c0_i32 = arith.constant 0 : i32
    %c0_i32_0 = arith.constant 0 : i32
    %c0_i32_1 = arith.constant 0 : i32
    return %c0_i32, %c0_i32_0 : i32, i32
  }
  func.func @transform_3(%arg0: i32, %arg1: i32) -> (i32, i32) {
    %c0_i32 = arith.constant 0 : i32
    %c0_i32_0 = arith.constant 0 : i32
    %c0_i32_1 = arith.constant 0 : i32
    return %c0_i32, %c0_i32_0 : i32, i32
  }
  func.func @transform_4(%arg0: i32, %arg1: i32) -> (i32, i32) {
    %c0_i32 = arith.constant 0 : i32
    %c0_i32_0 = arith.constant 0 : i32
    %c0_i32_1 = arith.constant 0 : i32
    return %c0_i32, %c0_i32_0 : i32, i32
  }
  func.func @transform_5(%arg0: i32, %arg1: i32) -> (i32, i32) {
    %c0_i32 = arith.constant 0 : i32
    %c0_i32_0 = arith.constant 0 : i32
    %c0_i32_1 = arith.constant 0 : i32
    return %c0_i32, %c0_i32_0 : i32, i32
  }
  func.func @transform_6(%arg0: i32, %arg1: i32) -> (i32, i32) {
    %c0_i32 = arith.constant 0 : i32
    %c0_i32_0 = arith.constant 0 : i32
    %c0_i32_1 = arith.constant 0 : i32
    return %c0_i32, %c0_i32_0 : i32, i32
  }
  func.func @transform_7(%arg0: i32, %arg1: i32) -> (i32, i32, i32) {
    %c0_i32 = arith.constant 0 : i32
    %c0_i32_0 = arith.constant 0 : i32
    return %arg1, %c0_i32, %arg0 : i32, i32, i32
  }
}

</mosaic_0001>

<llo_original>
// kernel: tcn_forward.2
$region0: #{tcn_forward.2}
  #allocation0 [shape = 'u32[]', space=smem, size = 0x4, offset = 0x4, fixed_abs, tag = 'smem constant byte address 0x4 - core index']
  #allocation1 [shape = 'u32[144,128]{1,0:T(1,128)}', space=vmem, size = 0x12000, scoped, tag = 'internal scratch']
  %s0 = inlined_call_operand.vmem [shape: f32[2,8,18], index: 0, kind: input, shape index: {}]
  %s1 = inlined_call_operand.vmem [shape: f32[8,16], index: 1, kind: input, shape index: {}]
  %s2 = inlined_call_operand.vmem [shape: f32[8,1], index: 2, kind: input, shape index: {}]
  %s3 = inlined_call_operand.vmem [shape: f32[8,16], index: 3, kind: input, shape index: {}]
  %s4 = inlined_call_operand.vmem [shape: f32[8,1], index: 4, kind: input, shape index: {}]
  %s5 = inlined_call_operand.vmem [shape: f32[8,8], index: 5, kind: input, shape index: {}]
  %s6 = inlined_call_operand.vmem [shape: f32[8,1], index: 6, kind: input, shape index: {}]
  %s7 = inlined_call_operand.vmem [shape: f32[2,8,16], index: 7, kind: output, shape index: {}]
  %s8 = sld [smem:[#allocation0]]
  $region61: #{tcn_forward.2} parent=0
    _
  %s10 = ssub.s32 1, %s8
  %s11 = scalar_select 0, %s10, %s8
  loop: start=0, step=1, limit=4
  $region2: #{tcn_forward.2} parent=0 // loop_pre_header
    _
  $region3: #{tcn_forward.2} parent=0 // loop_header
    %s13 = sphi 0, %s17
    %p14 = scmp.ge.s32.totalorder %s13, 4
    %s20 = sphi 0, %s32
    %s21 = sphi 0, %s28
    %s22 = sphi 0, %s20
    %s23 = sphi 0, %s21
    %s24 = sphi 0, %s22
    %s25 = sphi 0, %s23
    %s35 = sphi 0, %s37
    %s38 = sphi 0, %s35
    %s39 = sphi 0, %s38
    %s55 = sphi 0, %s39
    %s59 = sphi 0, %s59
    %s61 = sphi 0, %s59
    %s62 = sphi 0, %s61
    %s76 = sphi 0, %s62
    %s80 = sphi 0, %s80
    %s82 = sphi 0, %s80
    %s83 = sphi 0, %s82
    %s97 = sphi 0, %s83
    %s101 = sphi 0, %s101
    %s103 = sphi 0, %s101
    %s104 = sphi 0, %s103
    %s118 = sphi 0, %s104
    %s122 = sphi 0, %s122
    %s124 = sphi 0, %s122
    %s125 = sphi 0, %s124
    %s139 = sphi 0, %s125
    %s143 = sphi 0, %s143
    %s145 = sphi 0, %s143
    %s146 = sphi 0, %s145
    %s160 = sphi 0, %s146
    %s164 = sphi 0, %s164
    %s166 = sphi 0, %s164
    %s167 = sphi 0, %s166
    %s181 = sphi 0, %s167
    %s189 = sphi 0, %s191
    %s192 = sphi 0, %s189
    %s193 = sphi 0, %s192
    %s209 = sphi 0, %s193
  $region4: #{tcn_forward.2} parent=0 // loop_header_branch
    %16 = sbr.rel (%p14) target = $region8
  $region5: #{tcn_forward.2} parent=0 // loop_body
    %s18 = ssub.s32 %s13, 1
    %s19 = ssub.s32 %s13, 2
    %s26 = sadd.s32 1, %s21
    %p27 = scmp.ge.s32.totalorder %s26, 2
    %s28 = scalar_select %p27, 0, %s26
    %s29 = sadd.s32 1, %s20
    %s30 = scalar_select %p27, %s29, %s20
    %p31 = scmp.ge.s32.totalorder %s30, 1
    %s32 = scalar_select %p31, 0, %s30
    %s33 = ssub.s32 %s21, %s28
    %p34 = scmp.eq.s32.totalorder %s33, 0
    %s36 = sadd.s32 %s35, 1
    %s37 = scalar_select %p34, %s35, %s36
    %p40 = pneg %p34
    %p41 = scmp.eq.s32.totalorder %s13, 1
    %p42 = por %p40, %p41
    %p43 = scmp.ne.s32.totalorder %s35, %s38
    %p44 = scmp.eq.s32.totalorder %s13, 0
    %p45 = por %p43, %p44
    %p46 = scmp.ne.s32.totalorder %s35, %s38
    %p47 = scmp.eq.s32.totalorder %s18, 1
    %p48 = por %p46, %p47
    %p49 = scmp.ne.s32.totalorder %s38, %s39
    %p50 = scmp.eq.s32.totalorder %s18, 0
    %p51 = por %p49, %p50
    %p52 = scmp.ne.s32.totalorder %s38, %s39
    %p53 = scmp.eq.s32.totalorder %s19, 1
    %p54 = por %p52, %p53
    %p56 = scmp.ne.s32.totalorder %s39, %s55
    %p57 = scmp.eq.s32.totalorder %s19, 0
    %p58 = por %p56, %p57
    %s60 = sadd.s32 %s59, 1
    %p63 = scmp.eq.s32.totalorder %s13, 1
    %p64 = scmp.ne.s32.totalorder %s59, %s61
    %p65 = scmp.eq.s32.totalorder %s13, 0
    %p66 = por %p64, %p65
    %p67 = scmp.ne.s32.totalorder %s59, %s61
    %p68 = scmp.eq.s32.totalorder %s18, 1
    %p69 = por %p67, %p68
    %p70 = scmp.ne.s32.totalorder %s61, %s62
    %p71 = scmp.eq.s32.totalorder %s18, 0
    %p72 = por %p70, %p71
    %p73 = scmp.ne.s32.totalorder %s61, %s62
    %p74 = scmp.eq.s32.totalorder %s19, 1
    %p75 = por %p73, %p74
    %p77 = scmp.ne.s32.totalorder %s62, %s76
    %p78 = scmp.eq.s32.totalorder %s19, 0
    %p79 = por %p77, %p78
    %s81 = sadd.s32 %s80, 1
    %p84 = scmp.eq.s32.totalorder %s13, 1
    %p85 = scmp.ne.s32.totalorder %s80, %s82
    %p86 = scmp.eq.s32.totalorder %s13, 0
    %p87 = por %p85, %p86
    %p88 = scmp.ne.s32.totalorder %s80, %s82
    %p89 = scmp.eq.s32.totalorder %s18, 1
    %p90 = por %p88, %p89
    %p91 = scmp.ne.s32.totalorder %s82, %s83
    %p92 = scmp.eq.s32.totalorder %s18, 0
    %p93 = por %p91, %p92
    %p94 = scmp.ne.s32.totalorder %s82, %s83
    %p95 = scmp.eq.s32.totalorder %s19, 1
    %p96 = por %p94, %p95
    %p98 = scmp.ne.s32.totalorder %s83, %s97
    %p99 = scmp.eq.s32.totalorder %s19, 0
    %p100 = por %p98, %p99
    %s102 = sadd.s32 %s101, 1
    %p105 = scmp.eq.s32.totalorder %s13, 1
    %p106 = scmp.ne.s32.totalorder %s101, %s103
    %p107 = scmp.eq.s32.totalorder %s13, 0
    %p108 = por %p106, %p107
    %p109 = scmp.ne.s32.totalorder %s101, %s103
    %p110 = scmp.eq.s32.totalorder %s18, 1
    %p111 = por %p109, %p110
    %p112 = scmp.ne.s32.totalorder %s103, %s104
    %p113 = scmp.eq.s32.totalorder %s18, 0
    %p114 = por %p112, %p113
    %p115 = scmp.ne.s32.totalorder %s103, %s104
    %p116 = scmp.eq.s32.totalorder %s19, 1
    %p117 = por %p115, %p116
    %p119 = scmp.ne.s32.totalorder %s104, %s118
    %p120 = scmp.eq.s32.totalorder %s19, 0
    %p121 = por %p119, %p120
    %s123 = sadd.s32 %s122, 1
    %p126 = scmp.eq.s32.totalorder %s13, 1
    %p127 = scmp.ne.s32.totalorder %s122, %s124
    %p128 = scmp.eq.s32.totalorder %s13, 0
    %p129 = por %p127, %p128
    %p130 = scmp.ne.s32.totalorder %s122, %s124
    %p131 = scmp.eq.s32.totalorder %s18, 1
    %p132 = por %p130, %p131
    %p133 = scmp.ne.s32.totalorder %s124, %s125
    %p134 = scmp.eq.s32.totalorder %s18, 0
    %p135 = por %p133, %p134
    %p136 = scmp.ne.s32.totalorder %s124, %s125
    %p137 = scmp.eq.s32.totalorder %s19, 1
    %p138 = por %p136, %p137
    %p140 = scmp.ne.s32.totalorder %s125, %s139
    %p141 = scmp.eq.s32.totalorder %s19, 0
    %p142 = por %p140, %p141
    %s144 = sadd.s32 %s143, 1
    %p147 = scmp.eq.s32.totalorder %s13, 1
    %p148 = scmp.ne.s32.totalorder %s143, %s145
    %p149 = scmp.eq.s32.totalorder %s13, 0
    %p150 = por %p148, %p149
    %p151 = scmp.ne.s32.totalorder %s143, %s145
    %p152 = scmp.eq.s32.totalorder %s18, 1
    %p153 = por %p151, %p152
    %p154 = scmp.ne.s32.totalorder %s145, %s146
    %p155 = scmp.eq.s32.totalorder %s18, 0
    %p156 = por %p154, %p155
    %p157 = scmp.ne.s32.totalorder %s145, %s146
    %p158 = scmp.eq.s32.totalorder %s19, 1
    %p159 = por %p157, %p158
    %p161 = scmp.ne.s32.totalorder %s146, %s160
    %p162 = scmp.eq.s32.totalorder %s19, 0
    %p163 = por %p161, %p162
    %s165 = sadd.s32 %s164, 1
    %p168 = scmp.eq.s32.totalorder %s13, 1
    %p169 = scmp.ne.s32.totalorder %s164, %s166
    %p170 = scmp.eq.s32.totalorder %s13, 0
    %p171 = por %p169, %p170
    %p172 = scmp.ne.s32.totalorder %s164, %s166
    %p173 = scmp.eq.s32.totalorder %s18, 1
    %p174 = por %p172, %p173
    %p175 = scmp.ne.s32.totalorder %s166, %s167
    %p176 = scmp.eq.s32.totalorder %s18, 0
    %p177 = por %p175, %p176
    %p178 = scmp.ne.s32.totalorder %s166, %s167
    %p179 = scmp.eq.s32.totalorder %s19, 1
    %p180 = por %p178, %p179
    %p182 = scmp.ne.s32.totalorder %s167, %s181
    %p183 = scmp.eq.s32.totalorder %s19, 0
    %p184 = por %p182, %p183
    %s185 = ssub.s32 %s21, %s28
    %s186 = ssub.s32 %s20, %s32
    %s187 = sor.u32 %s185, %s186
    %p188 = scmp.eq.s32.totalorder %s187, 0
    %s190 = sadd.s32 %s189, 1
    %s191 = scalar_select %p188, %s189, %s190
    %p194 = pneg %p188
    %p195 = scmp.eq.s32.totalorder %s13, 1
    %p196 = por %p194, %p195
    %p197 = scmp.ne.s32.totalorder %s189, %s192
    %p198 = scmp.eq.s32.totalorder %s13, 0
    %p199 = por %p197, %p198
    %p200 = scmp.ne.s32.totalorder %s189, %s192
    %p201 = scmp.eq.s32.totalorder %s18, 1
    %p202 = por %p200, %p201
    %p203 = scmp.ne.s32.totalorder %s192, %s193
    %p204 = scmp.eq.s32.totalorder %s18, 0
    %p205 = por %p203, %p204
    %p206 = scmp.ne.s32.totalorder %s192, %s193
    %p207 = scmp.eq.s32.totalorder %s19, 1
    %p208 = por %p206, %p207
    %p210 = scmp.ne.s32.totalorder %s193, %s209
    %p211 = scmp.eq.s32.totalorder %s19, 0
    %p212 = por %p210, %p211
    %p213 = scmp.le.s32.totalorder 1, %s13
    %p214 = scmp.lt.s32.totalorder %s13, 3
    %p215 = pnand %p213, %p214
    %p216 = pneg %p215
    // Predicated region
    $region9: #{tcn_forward.2} parent=5 // pred_check
      _
    $region10: #{tcn_forward.2} parent=5 // pred_check_branch
      %218 = sbr.rel (%p215) target = $region12
    $region11: #{tcn_forward.2} parent=5 // pred_region
      %s219 = ssub.s32 %s13, 1
      // Predicated region
      $region13: #{tcn_forward.2} parent=11 // pred_check
        %p220 = pneg %p72
      $region14: #{tcn_forward.2} parent=11 // pred_check_branch
        %222 = sbr.rel (%p220) target = $region16
      $region15: #{tcn_forward.2} parent=11 // pred_region
        _
      $region16: #{tcn_forward.2} parent=11 // pred_fallthru
        _
      // Predicated region
      $region17: #{tcn_forward.2} parent=11 // pred_check
        %p223 = pneg %p93
      $region18: #{tcn_forward.2} parent=11 // pred_check_branch
        %225 = sbr.rel (%p223) target = $region20
      $region19: #{tcn_forward.2} parent=11 // pred_region
        _
      $region20: #{tcn_forward.2} parent=11 // pred_fallthru
        _
      // Predicated region
      $region21: #{tcn_forward.2} parent=11 // pred_check
        %p226 = pneg %p114
      $region22: #{tcn_forward.2} parent=11 // pred_check_branch
        %228 = sbr.rel (%p226) target = $region24
      $region23: #{tcn_forward.2} parent=11 // pred_region
        _
      $region24: #{tcn_forward.2} parent=11 // pred_fallthru
        _
      // Predicated region
      $region25: #{tcn_forward.2} parent=11 // pred_check
        %p229 = pneg %p135
      $region26: #{tcn_forward.2} parent=11 // pred_check_branch
        %231 = sbr.rel (%p229) target = $region28
      $region27: #{tcn_forward.2} parent=11 // pred_region
        _
      $region28: #{tcn_forward.2} parent=11 // pred_fallthru
        _
      // Predicated region
      $region29: #{tcn_forward.2} parent=11 // pred_check
        %p232 = pneg %p156
      $region30: #{tcn_forward.2} parent=11 // pred_check_branch
        %234 = sbr.rel (%p232) target = $region32
      $region31: #{tcn_forward.2} parent=11 // pred_region
        _
      $region32: #{tcn_forward.2} parent=11 // pred_fallthru
        _
      // Predicated region
      $region33: #{tcn_forward.2} parent=11 // pred_check
        %p235 = pneg %p177
      $region34: #{tcn_forward.2} parent=11 // pred_check_branch
        %237 = sbr.rel (%p235) target = $region36
      $region35: #{tcn_forward.2} parent=11 // pred_region
        _
      $region36: #{tcn_forward.2} parent=11 // pred_fallthru
        _
    $region12: #{tcn_forward.2} parent=5 // pred_fallthru
      _
    %p238 = scmp.lt.s32.totalorder %s13, 2
    // Predicated region
    $region37: #{tcn_forward.2} parent=5 // pred_check
      %p239 = pneg %p238
    $region38: #{tcn_forward.2} parent=5 // pred_check_branch
      %241 = sbr.rel (%p239) target = $region40
    $region39: #{tcn_forward.2} parent=5 // pred_region
      // Predicated region
      $region41: #{tcn_forward.2} parent=39 // pred_check
        %p242 = pneg %p45
      $region42: #{tcn_forward.2} parent=39 // pred_check_branch
        %244 = sbr.rel (%p242) target = $region44
      $region43: #{tcn_forward.2} parent=39 // pred_region
        %p245 = scmp.lt.s32.totalorder %s21, 1
        %s246 = scalar_select %p245, %s21, 1
        %s247 = smul.addr %s246, 8
        %s248 = scalar_lea.vmem %s0, %s247
      $region44: #{tcn_forward.2} parent=39 // pred_fallthru
        _
    $region40: #{tcn_forward.2} parent=5 // pred_fallthru
      _
    %p249 = scmp.le.s32.totalorder 1, %s13
    %p250 = scmp.lt.s32.totalorder %s13, 3
    %p251 = pnand %p249, %p250
    %p252 = pneg %p251
    // Predicated region
    $region45: #{tcn_forward.2} parent=5 // pred_check
      _
    $region46: #{tcn_forward.2} parent=5 // pred_check_branch
      %254 = sbr.rel (%p251) target = $region48
    $region47: #{tcn_forward.2} parent=5 // pred_region
      %s255 = ssub.s32 %s13, 1
      %p256 = scmp.lt.s32.totalorder %s23, 1
      %s257 = scalar_select %p256, %s23, 1
      %s258 = smul.addr %s257, 8
      %s259 = scalar_lea.vmem %s0, %s258
      %p260 = pneg %p51
      %p261 = pneg %p48
      %p262 = pneg %p72
      %p263 = pneg %p69
      %p264 = pneg %p93
      %p265 = pneg %p90
      %p266 = pneg %p114
      %p267 = pneg %p111
      %p268 = pneg %p135
      %p269 = pneg %p132
      %p270 = pneg %p156
      %p271 = pneg %p153
      %p272 = pneg %p177
      %p273 = pneg %p174
      %p274 = pneg %p205
      %p275 = pneg %p202
      %p276 = scmp.lt.s32.totalorder %s23, 1
      %s277 = scalar_select %p276, %s23, 1
      %p278 = scmp.lt.s32.totalorder %s22, 0
      %s279 = scalar_select %p278, %s22, 0
      %s280 = sadd.s32 %s279, %s277
      %s281 = smul.addr %s280, 8
      %s282 = scalar_lea.vmem %s7, %s281
      %p283 = scmp.lt.s32.totalorder %s23, 1
      %s284 = scalar_select %p283, %s23, 1
      %s285 = smul.addr %s284, 8
      %s286 = scalar_lea.vmem %s0, %s285
      %p287 = scmp.lt.s32.totalorder %s23, 1
      %s288 = scalar_select %p287, %s23, 1
      %p289 = scmp.lt.s32.totalorder %s22, 0
      %s290 = scalar_select %p289, %s22, 0
      %s291 = sadd.s32 %s290, %s288
      %s292 = smul.addr %s291, 8
      %s293 = scalar_lea.vmem %s7, %s292
      %v294 = vld [vmem:[%s286] sm:$0xff]
      %296 = vrot.lane.b32.xlu0 %v294, 127
      %v297 = vpop.permute.xlu0 %296
      %v299 = vld [vmem:[%s1] sm:$0xff]
      %v300 = vld [vmem:[%s2] sm:$0xff]
      %302 = vset.pattern.permute.xlu0 0
      %303 = vperm.xlu0 %302, %v300
      %v304 = vpop.permute.xlu0 %303
      %vm306 = vcmask 130048
      %v308 = vsel %vm306, %v299, 0
      %310 = vmatprep.subr.mxu0 0.0
      %311 = vmatpush1.msra.mxu0 0.0
      %312 = vmatprep.subr.mxu0 0.0
      %313 = vmatpush1.msra.mxu0 0.0
      %314 = vmatprep.subr.mxu0 0.0
      %315 = vmatpush1.msra.mxu0 0.0
      %316 = vmatprep.subr.mxu0 0.0
      %317 = vmatpush1.msra.mxu0 0.0
      %318 = vmatprep.subr.mxu0 0.0
      %319 = vmatpush1.msra.mxu0 0.0
      %320 = vmatprep.subr.mxu0 0.0
      %321 = vmatpush1.msra.mxu0 0.0
      %322 = vmatprep.subr.mxu0 0.0
      %323 = vmatpush1.msra.mxu0 0.0
      %324 = vmatprep.subr.mxu0 0.0
      %325 = vmatpush1.msra.mxu0 0.0
      %326 = vmatprep.subr.mxu0 0.0
      %327 = vmatpush1.msra.mxu0 0.0
      %328 = vmatprep.subr.mxu0 0.0
      %329 = vmatpush1.msra.mxu0 0.0
      %330 = vmatprep.subr.mxu0 0.0
      %331 = vmatpush1.msra.mxu0 0.0
      %332 = vmatprep.subr.mxu0 0.0
      %333 = vmatpush1.msra.mxu0 0.0
      %334 = vmatprep.subr.mxu0 0.0
      %335 = vmatpush1.msra.mxu0 0.0
      %336 = vmatprep.subr.mxu0 0.0
      %337 = vmatpush1.msra.mxu0 0.0
      %338 = vmatprep.subr.mxu0 0.0
      %339 = vmatpush1.msra.mxu0 %v297
      %340 = vmatprep.subr.mxu0 0.0
      %341 = vmatpush1.msra.mxu0 %v294
      %342 = vmatprep.subr.mxu0 0.0
      %343 = vmatpush2.msra.mxu0 0.0
      %344 = vmatprep.subr.mxu0 0.0
      %345 = vmatpush2.msra.mxu0 0.0
      %346 = vmatprep.subr.mxu0 0.0
      %347 = vmatpush2.msra.mxu0 0.0
      %348 = vmatprep.subr.mxu0 0.0
      %349 = vmatpush2.msra.mxu0 0.0
      %350 = vmatprep.subr.mxu0 0.0
      %351 = vmatpush2.msra.mxu0 0.0
      %352 = vmatprep.subr.mxu0 0.0
      %353 = vmatpush2.msra.mxu0 0.0
      %354 = vmatprep.subr.mxu0 0.0
      %355 = vmatpush2.msra.mxu0 0.0
      %356 = vmatprep.subr.mxu0 0.0
      %357 = vmatpush2.msra.mxu0 0.0
      %358 = vmatprep.subr.mxu0 0.0
      %359 = vmatpush2.msra.mxu0 0.0
      %360 = vmatprep.subr.mxu0 0.0
      %361 = vmatpush2.msra.mxu0 0.0
      %362 = vmatprep.subr.mxu0 0.0
      %363 = vmatpush2.msra.mxu0 0.0
      %364 = vmatprep.subr.mxu0 0.0
      %365 = vmatpush2.msra.mxu0 0.0
      %366 = vmatprep.subr.mxu0 0.0
      %367 = vmatpush2.msra.mxu0 0.0
      %368 = vmatprep.subr.mxu0 0.0
      %369 = vmatpush2.msra.mxu0 0.0
      %370 = vmatprep.subr.mxu0 0.0
      %371 = vmatpush2.msra.mxu0 0.0
      %372 = vmatprep.subr.mxu0 0.0
      %373 = vmatpush2.msra.mxu0 0.0
      %374 = vmatprep.mubr.f32.mxu0 0.0
      %375 = vmatmul.mubr.f32.gmra.mxu0 %v308
      %v376 = vpop.f32.mrf.mxu0
      %v377 = vadd.f32 %v304, %v376
      %v378 = vpop.f32.mrf.mxu0
      %379 = vdwg.mxu0
      %v380 = vmax.f32 %v377, 0.0
      %v381 = vlaneseq
      %v382 = vand.u32 %v381, 127
      %s383 = smul.u32 %s22, 16
      %s384 = ssub.s32 %s383, 1
      %v385 = vstv %s384
      %v386 = vadd.s32 %v385, %v382
      %vm387 = vcmp.ge.s32.totalorder %v386, 0
      %v388 = vsel %vm387, 1, 0
      %vm389 = vcmp.eq.s32.totalorder %v388, 1
      %v390 = vsel %vm389, %v380, 0.0
      %392 = vrot.lane.b32.xlu0 %v390, 127
      %v393 = vpop.permute.xlu0 %392
      %v395 = vld [vmem:[%s3] sm:$0xff]
      %v396 = vld [vmem:[%s4] sm:$0xff]
      %398 = vset.pattern.permute.xlu0 0
      %399 = vperm.xlu0 %398, %v396
      %v400 = vpop.permute.xlu0 %399
      %v403 = vsel %vm306, %v395, 0
      %405 = vmatprep.subr.mxu0 0.0
      %406 = vmatpush1.msra.mxu0 0.0
      %407 = vmatprep.subr.mxu0 0.0
      %408 = vmatpush1.msra.mxu0 0.0
      %409 = vmatprep.subr.mxu0 0.0
      %410 = vmatpush1.msra.mxu0 0.0
      %411 = vmatprep.subr.mxu0 0.0
      %412 = vmatpush1.msra.mxu0 0.0
      %413 = vmatprep.subr.mxu0 0.0
      %414 = vmatpush1.msra.mxu0 0.0
      %415 = vmatprep.subr.mxu0 0.0
      %416 = vmatpush1.msra.mxu0 0.0
      %417 = vmatprep.subr.mxu0 0.0
      %418 = vmatpush1.msra.mxu0 0.0
      %419 = vmatprep.subr.mxu0 0.0
      %420 = vmatpush1.msra.mxu0 0.0
      %421 = vmatprep.subr.mxu0 0.0
      %422 = vmatpush1.msra.mxu0 0.0
      %423 = vmatprep.subr.mxu0 0.0
      %424 = vmatpush1.msra.mxu0 0.0
      %425 = vmatprep.subr.mxu0 0.0
      %426 = vmatpush1.msra.mxu0 0.0
      %427 = vmatprep.subr.mxu0 0.0
      %428 = vmatpush1.msra.mxu0 0.0
      %429 = vmatprep.subr.mxu0 0.0
      %430 = vmatpush1.msra.mxu0 0.0
      %431 = vmatprep.subr.mxu0 0.0
      %432 = vmatpush1.msra.mxu0 0.0
      %433 = vmatprep.subr.mxu0 0.0
      %434 = vmatpush1.msra.mxu0 %v393
      %435 = vmatprep.subr.mxu0 0.0
      %436 = vmatpush1.msra.mxu0 %v390
      %437 = vmatprep.subr.mxu0 0.0
      %438 = vmatpush2.msra.mxu0 0.0
      %439 = vmatprep.subr.mxu0 0.0
      %440 = vmatpush2.msra.mxu0 0.0
      %441 = vmatprep.subr.mxu0 0.0
      %442 = vmatpush2.msra.mxu0 0.0
      %443 = vmatprep.subr.mxu0 0.0
      %444 = vmatpush2.msra.mxu0 0.0
      %445 = vmatprep.subr.mxu0 0.0
      %446 = vmatpush2.msra.mxu0 0.0
      %447 = vmatprep.subr.mxu0 0.0
      %448 = vmatpush2.msra.mxu0 0.0
      %449 = vmatprep.subr.mxu0 0.0
      %450 = vmatpush2.msra.mxu0 0.0
      %451 = vmatprep.subr.mxu0 0.0
      %452 = vmatpush2.msra.mxu0 0.0
      %453 = vmatprep.subr.mxu0 0.0
      %454 = vmatpush2.msra.mxu0 0.0
      %455 = vmatprep.subr.mxu0 0.0
      %456 = vmatpush2.msra.mxu0 0.0
      %457 = vmatprep.subr.mxu0 0.0
      %458 = vmatpush2.msra.mxu0 0.0
      %459 = vmatprep.subr.mxu0 0.0
      %460 = vmatpush2.msra.mxu0 0.0
      %461 = vmatprep.subr.mxu0 0.0
      %462 = vmatpush2.msra.mxu0 0.0
      %463 = vmatprep.subr.mxu0 0.0
      %464 = vmatpush2.msra.mxu0 0.0
      %465 = vmatprep.subr.mxu0 0.0
      %466 = vmatpush2.msra.mxu0 0.0
      %467 = vmatprep.subr.mxu0 0.0
      %468 = vmatpush2.msra.mxu0 0.0
      %469 = vmatprep.mubr.f32.mxu0 0.0
      %470 = vmatmul.mubr.f32.gmra.mxu0 %v403
      %v471 = vpop.f32.mrf.mxu0
      %v472 = vadd.f32 %v400, %v471
      %v473 = vpop.f32.mrf.mxu0
      %474 = vdwg.mxu0
      %v475 = vmax.f32 %v472, 0.0
      %v476 = vld [vmem:[%s5] sm:$0xff]
      %v477 = vld [vmem:[%s6] sm:$0xff]
      %479 = vset.pattern.permute.xlu0 0
      %480 = vperm.xlu0 %479, %v477
      %v481 = vpop.permute.xlu0 %480
      %483 = vrot.lane.b32.xlu0 %v294, 126
      %v484 = vpop.permute.xlu0 %483
      %vm486 = vcmask 64512
      %v488 = vsel %vm486, %v476, 0
      %490 = vmatprep.subr.mxu0 0.0
      %491 = vmatpush1.msra.mxu0 0.0
      %492 = vmatprep.subr.mxu0 0.0
      %493 = vmatpush1.msra.mxu0 0.0
      %494 = vmatprep.subr.mxu0 0.0
      %495 = vmatpush1.msra.mxu0 0.0
      %496 = vmatprep.subr.mxu0 0.0
      %497 = vmatpush1.msra.mxu0 0.0
      %498 = vmatprep.subr.mxu0 0.0
      %499 = vmatpush1.msra.mxu0 0.0
      %500 = vmatprep.subr.mxu0 0.0
      %501 = vmatpush1.msra.mxu0 0.0
      %502 = vmatprep.subr.mxu0 0.0
      %503 = vmatpush1.msra.mxu0 0.0
      %504 = vmatprep.subr.mxu0 0.0
      %505 = vmatpush1.msra.mxu0 0.0
      %506 = vmatprep.subr.mxu0 0.0
      %507 = vmatpush1.msra.mxu0 0.0
      %508 = vmatprep.subr.mxu0 0.0
      %509 = vmatpush1.msra.mxu0 0.0
      %510 = vmatprep.subr.mxu0 0.0
      %511 = vmatpush1.msra.mxu0 0.0
      %512 = vmatprep.subr.mxu0 0.0
      %513 = vmatpush1.msra.mxu0 0.0
      %514 = vmatprep.subr.mxu0 0.0
      %515 = vmatpush1.msra.mxu0 0.0
      %516 = vmatprep.subr.mxu0 0.0
      %517 = vmatpush1.msra.mxu0 0.0
      %518 = vmatprep.subr.mxu0 0.0
      %519 = vmatpush1.msra.mxu0 0.0
      %520 = vmatprep.subr.mxu0 0.0
      %521 = vmatpush1.msra.mxu0 %v484
      %522 = vmatprep.subr.mxu0 0.0
      %523 = vmatpush2.msra.mxu0 0.0
      %524 = vmatprep.subr.mxu0 0.0
      %525 = vmatpush2.msra.mxu0 0.0
      %526 = vmatprep.subr.mxu0 0.0
      %527 = vmatpush2.msra.mxu0 0.0
      %528 = vmatprep.subr.mxu0 0.0
      %529 = vmatpush2.msra.mxu0 0.0
      %530 = vmatprep.subr.mxu0 0.0
      %531 = vmatpush2.msra.mxu0 0.0
      %532 = vmatprep.subr.mxu0 0.0
      %533 = vmatpush2.msra.mxu0 0.0
      %534 = vmatprep.subr.mxu0 0.0
      %535 = vmatpush2.msra.mxu0 0.0
      %536 = vmatprep.subr.mxu0 0.0
      %537 = vmatpush2.msra.mxu0 0.0
      %538 = vmatprep.subr.mxu0 0.0
      %539 = vmatpush2.msra.mxu0 0.0
      %540 = vmatprep.subr.mxu0 0.0
      %541 = vmatpush2.msra.mxu0 0.0
      %542 = vmatprep.subr.mxu0 0.0
      %543 = vmatpush2.msra.mxu0 0.0
      %544 = vmatprep.subr.mxu0 0.0
      %545 = vmatpush2.msra.mxu0 0.0
      %546 = vmatprep.subr.mxu0 0.0
      %547 = vmatpush2.msra.mxu0 0.0
      %548 = vmatprep.subr.mxu0 0.0
      %549 = vmatpush2.msra.mxu0 0.0
      %550 = vmatprep.subr.mxu0 0.0
      %551 = vmatpush2.msra.mxu0 0.0
      %552 = vmatprep.subr.mxu0 0.0
      %553 = vmatpush2.msra.mxu0 0.0
      %554 = vmatprep.mubr.f32.mxu0 0.0
      %555 = vmatmul.mubr.f32.gmra.mxu0 %v488
      %v556 = vpop.f32.mrf.mxu0
      %v557 = vadd.f32 %v481, %v556
      %v558 = vpop.f32.mrf.mxu0
      %559 = vdwg.mxu0
      %v560 = vadd.f32 %v475, %v557
      %v561 = vmax.f32 %v560, 0.0
      %562 = vst.msk [vmem:[%s293] sm:$0xff] %vm306, %v561
      %p563 = scmp.lt.s32.totalorder %s23, 1
      %s564 = scalar_select %p563, %s23, 1
      %p565 = scmp.lt.s32.totalorder %s22, 0
      %s566 = scalar_select %p565, %s22, 0
      %s567 = sadd.s32 %s566, %s564
      %s568 = smul.addr %s567, 8
      %s569 = scalar_lea.vmem %s7, %s568
      // Predicated region
      $region49: #{tcn_forward.2} parent=47 // pred_check
        %p570 = pneg %p202
      $region50: #{tcn_forward.2} parent=47 // pred_check_branch
        %572 = sbr.rel (%p570) target = $region52
      $region51: #{tcn_forward.2} parent=47 // pred_region
        _
      $region52: #{tcn_forward.2} parent=47 // pred_fallthru
        _
    $region48: #{tcn_forward.2} parent=5 // pred_fallthru
      _
    %p573 = scmp.le.s32.totalorder 2, %s13
    // Predicated region
    $region53: #{tcn_forward.2} parent=5 // pred_check
      %p574 = pneg %p573
    $region54: #{tcn_forward.2} parent=5 // pred_check_branch
      %576 = sbr.rel (%p574) target = $region56
    $region55: #{tcn_forward.2} parent=5 // pred_region
      %s577 = ssub.s32 %s13, 2
      // Predicated region
      $region57: #{tcn_forward.2} parent=55 // pred_check
        %p578 = pneg %p208
      $region58: #{tcn_forward.2} parent=55 // pred_check_branch
        %580 = sbr.rel (%p578) target = $region60
      $region59: #{tcn_forward.2} parent=55 // pred_region
        %p581 = scmp.lt.s32.totalorder %s25, 1
        %s582 = scalar_select %p581, %s25, 1
        %p583 = scmp.lt.s32.totalorder %s24, 0
        %s584 = scalar_select %p583, %s24, 0
        %s585 = sadd.s32 %s584, %s582
        %s586 = smul.addr %s585, 8
        %s587 = scalar_lea.vmem %s7, %s586
      $region60: #{tcn_forward.2} parent=55 // pred_fallthru
        _
    $region56: #{tcn_forward.2} parent=5 // pred_fallthru
      _
  $region6: #{tcn_forward.2} parent=0 // loop_footer
    %s17 = sadd.s32 1, %s13
  $region7: #{tcn_forward.2} parent=0 // loop_footer_branch
    %12 = sbr.rel target = $region3
  $region8: #{tcn_forward.2} parent=0 // loop_exit
    _

// kernel: tcn_forward.3
$region0: #{tcn_forward.3}
  #allocation0 [shape = 'u32[]', space=smem, size = 0x4, offset = 0x4, fixed_abs, tag = 'smem constant byte address 0x4 - core index']
  #allocation1 [shape = 'u32[144,128]{1,0:T(1,128)}', space=vmem, size = 0x12000, scoped, tag = 'internal scratch']
  %s0 = inlined_call_operand.vmem [shape: f32[2,8,20], index: 0, kind: input, shape index: {}]
  %s1 = inlined_call_operand.vmem [shape: f32[8,16], index: 1, kind: input, shape index: {}]
  %s2 = inlined_call_operand.vmem [shape: f32[8,1], index: 2, kind: input, shape index: {}]
  %s3 = inlined_call_operand.vmem [shape: f32[8,16], index: 3, kind: input, shape index: {}]
  %s4 = inlined_call_operand.vmem [shape: f32[8,1], index: 4, kind: input, shape index: {}]
  %s5 = inlined_call_operand.hbm [shape: f32[2,8,16], index: 5, kind: output, shape index: {}]
  %s6 = sld [smem:[#allocation0]]
  $region53: #{tcn_forward.3} parent=0
    _
  %s8 = ssub.s32 1, %s6
  %s9 = scalar_select 0, %s8, %s6
  $region1: #{tcn_forward.3} parent=0
    #allocation2 [shape = 'u8[8192]{0}', space=vmem, size = 0x2000, scoped, tag = 'output window, operand 0']
    #allocation3 [shape = 's32[2]{0}', space=sflag, size = 0x8, scoped, tag = 'scoped memory for tcn_forward.3']
    %10 = vsyncpa [#allocation3], 0
    %s11 = scalar_lea.sflag [#allocation3], 1
    %12 = vsyncpa %s11, 0
    loop: start=0, step=1, limit=4
    $region2: #{tcn_forward.3} parent=1 // loop_pre_header
      _
    $region3: #{tcn_forward.3} parent=1 // loop_header
      %s14 = sphi 0, %s18
      %p15 = scmp.ge.s32.totalorder %s14, 4
      %s21 = sphi 0, %s33
      %s22 = sphi 0, %s29
      %s23 = sphi 0, %s21
      %s24 = sphi 0, %s22
      %s25 = sphi 0, %s23
      %s26 = sphi 0, %s24
      %s36 = sphi 0, %s38
      %s39 = sphi 0, %s36
      %s40 = sphi 0, %s39
      %s56 = sphi 0, %s40
      %s60 = sphi 0, %s60
      %s62 = sphi 0, %s60
      %s63 = sphi 0, %s62
      %s77 = sphi 0, %s63
      %s81 = sphi 0, %s81
      %s83 = sphi 0, %s81
      %s84 = sphi 0, %s83
      %s98 = sphi 0, %s84
      %s102 = sphi 0, %s102
      %s104 = sphi 0, %s102
      %s105 = sphi 0, %s104
      %s119 = sphi 0, %s105
      %s123 = sphi 0, %s123
      %s125 = sphi 0, %s123
      %s126 = sphi 0, %s125
      %s140 = sphi 0, %s126
      %s148 = sphi 0, %s150
      %s151 = sphi 0, %s148
      %s152 = sphi 0, %s151
      %s168 = sphi 0, %s152
    $region4: #{tcn_forward.3} parent=1 // loop_header_branch
      %17 = sbr.rel (%p15) target = $region8
    $region5: #{tcn_forward.3} parent=1 // loop_body
      %s19 = ssub.s32 %s14, 1
      %s20 = ssub.s32 %s14, 2
      %s27 = sadd.s32 1, %s22
      %p28 = scmp.ge.s32.totalorder %s27, 2
      %s29 = scalar_select %p28, 0, %s27
      %s30 = sadd.s32 1, %s21
      %s31 = scalar_select %p28, %s30, %s21
      %p32 = scmp.ge.s32.totalorder %s31, 1
      %s33 = scalar_select %p32, 0, %s31
      %s34 = ssub.s32 %s22, %s29
      %p35 = scmp.eq.s32.totalorder %s34, 0
      %s37 = sadd.s32 %s36, 1
      %s38 = scalar_select %p35, %s36, %s37
      %p41 = pneg %p35
      %p42 = scmp.eq.s32.totalorder %s14, 1
      %p43 = por %p41, %p42
      %p44 = scmp.ne.s32.totalorder %s36, %s39
      %p45 = scmp.eq.s32.totalorder %s14, 0
      %p46 = por %p44, %p45
      %p47 = scmp.ne.s32.totalorder %s36, %s39
      %p48 = scmp.eq.s32.totalorder %s19, 1
      %p49 = por %p47, %p48
      %p50 = scmp.ne.s32.totalorder %s39, %s40
      %p51 = scmp.eq.s32.totalorder %s19, 0
      %p52 = por %p50, %p51
      %p53 = scmp.ne.s32.totalorder %s39, %s40
      %p54 = scmp.eq.s32.totalorder %s20, 1
      %p55 = por %p53, %p54
      %p57 = scmp.ne.s32.totalorder %s40, %s56
      %p58 = scmp.eq.s32.totalorder %s20, 0
      %p59 = por %p57, %p58
      %s61 = sadd.s32 %s60, 1
      %p64 = scmp.eq.s32.totalorder %s14, 1
      %p65 = scmp.ne.s32.totalorder %s60, %s62
      %p66 = scmp.eq.s32.totalorder %s14, 0
      %p67 = por %p65, %p66
      %p68 = scmp.ne.s32.totalorder %s60, %s62
      %p69 = scmp.eq.s32.totalorder %s19, 1
      %p70 = por %p68, %p69
      %p71 = scmp.ne.s32.totalorder %s62, %s63
      %p72 = scmp.eq.s32.totalorder %s19, 0
      %p73 = por %p71, %p72
      %p74 = scmp.ne.s32.totalorder %s62, %s63
      %p75 = scmp.eq.s32.totalorder %s20, 1
      %p76 = por %p74, %p75
      %p78 = scmp.ne.s32.totalorder %s63, %s77
      %p79 = scmp.eq.s32.totalorder %s20, 0
      %p80 = por %p78, %p79
      %s82 = sadd.s32 %s81, 1
      %p85 = scmp.eq.s32.totalorder %s14, 1
      %p86 = scmp.ne.s32.totalorder %s81, %s83
      %p87 = scmp.eq.s32.totalorder %s14, 0
      %p88 = por %p86, %p87
      %p89 = scmp.ne.s32.totalorder %s81, %s83
      %p90 = scmp.eq.s32.totalorder %s19, 1
      %p91 = por %p89, %p90
      %p92 = scmp.ne.s32.totalorder %s83, %s84
      %p93 = scmp.eq.s32.totalorder %s19, 0
      %p94 = por %p92, %p93
      %p95 = scmp.ne.s32.totalorder %s83, %s84
      %p96 = scmp.eq.s32.totalorder %s20, 1
      %p97 = por %p95, %p96
      %p99 = scmp.ne.s32.totalorder %s84, %s98
      %p100 = scmp.eq.s32.totalorder %s20, 0
      %p101 = por %p99, %p100
      %s103 = sadd.s32 %s102, 1
      %p106 = scmp.eq.s32.totalorder %s14, 1
      %p107 = scmp.ne.s32.totalorder %s102, %s104
      %p108 = scmp.eq.s32.totalorder %s14, 0
      %p109 = por %p107, %p108
      %p110 = scmp.ne.s32.totalorder %s102, %s104
      %p111 = scmp.eq.s32.totalorder %s19, 1
      %p112 = por %p110, %p111
      %p113 = scmp.ne.s32.totalorder %s104, %s105
      %p114 = scmp.eq.s32.totalorder %s19, 0
      %p115 = por %p113, %p114
      %p116 = scmp.ne.s32.totalorder %s104, %s105
      %p117 = scmp.eq.s32.totalorder %s20, 1
      %p118 = por %p116, %p117
      %p120 = scmp.ne.s32.totalorder %s105, %s119
      %p121 = scmp.eq.s32.totalorder %s20, 0
      %p122 = por %p120, %p121
      %s124 = sadd.s32 %s123, 1
      %p127 = scmp.eq.s32.totalorder %s14, 1
      %p128 = scmp.ne.s32.totalorder %s123, %s125
      %p129 = scmp.eq.s32.totalorder %s14, 0
      %p130 = por %p128, %p129
      %p131 = scmp.ne.s32.totalorder %s123, %s125
      %p132 = scmp.eq.s32.totalorder %s19, 1
      %p133 = por %p131, %p132
      %p134 = scmp.ne.s32.totalorder %s125, %s126
      %p135 = scmp.eq.s32.totalorder %s19, 0
      %p136 = por %p134, %p135
      %p137 = scmp.ne.s32.totalorder %s125, %s126
      %p138 = scmp.eq.s32.totalorder %s20, 1
      %p139 = por %p137, %p138
      %p141 = scmp.ne.s32.totalorder %s126, %s140
      %p142 = scmp.eq.s32.totalorder %s20, 0
      %p143 = por %p141, %p142
      %s144 = ssub.s32 %s22, %s29
      %s145 = ssub.s32 %s21, %s33
      %s146 = sor.u32 %s144, %s145
      %p147 = scmp.eq.s32.totalorder %s146, 0
      %s149 = sadd.s32 %s148, 1
      %s150 = scalar_select %p147, %s148, %s149
      %p153 = pneg %p147
      %p154 = scmp.eq.s32.totalorder %s14, 1
      %p155 = por %p153, %p154
      %p156 = scmp.ne.s32.totalorder %s148, %s151
      %p157 = scmp.eq.s32.totalorder %s14, 0
      %p158 = por %p156, %p157
      %p159 = scmp.ne.s32.totalorder %s148, %s151
      %p160 = scmp.eq.s32.totalorder %s19, 1
      %p161 = por %p159, %p160
      %p162 = scmp.ne.s32.totalorder %s151, %s152
      %p163 = scmp.eq.s32.totalorder %s19, 0
      %p164 = por %p162, %p163
      %p165 = scmp.ne.s32.totalorder %s151, %s152
      %p166 = scmp.eq.s32.totalorder %s20, 1
      %p167 = por %p165, %p166
      %p169 = scmp.ne.s32.totalorder %s152, %s168
      %p170 = scmp.eq.s32.totalorder %s20, 0
      %p171 = por %p169, %p170
      %p172 = scmp.le.s32.totalorder 1, %s14
      %p173 = scmp.lt.s32.totalorder %s14, 3
      %p174 = pnand %p172, %p173
      %p175 = pneg %p174
      // Predicated region
      $region9: #{tcn_forward.3} parent=5 // pred_check
        _
      $region10: #{tcn_forward.3} parent=5 // pred_check_branch
        %177 = sbr.rel (%p174) target = $region12
      $region11: #{tcn_forward.3} parent=5 // pred_region
        %s178 = ssub.s32 %s14, 1
        // Predicated region
        $region13: #{tcn_forward.3} parent=11 // pred_check
          %p179 = pneg %p73
        $region14: #{tcn_forward.3} parent=11 // pred_check_branch
          %181 = sbr.rel (%p179) target = $region16
        $region15: #{tcn_forward.3} parent=11 // pred_region
          _
        $region16: #{tcn_forward.3} parent=11 // pred_fallthru
          _
        // Predicated region
        $region17: #{tcn_forward.3} parent=11 // pred_check
          %p182 = pneg %p94
        $region18: #{tcn_forward.3} parent=11 // pred_check_branch
          %184 = sbr.rel (%p182) target = $region20
        $region19: #{tcn_forward.3} parent=11 // pred_region
          _
        $region20: #{tcn_forward.3} parent=11 // pred_fallthru
          _
        // Predicated region
        $region21: #{tcn_forward.3} parent=11 // pred_check
          %p185 = pneg %p115
        $region22: #{tcn_forward.3} parent=11 // pred_check_branch
          %187 = sbr.rel (%p185) target = $region24
        $region23: #{tcn_forward.3} parent=11 // pred_region
          _
        $region24: #{tcn_forward.3} parent=11 // pred_fallthru
          _
        // Predicated region
        $region25: #{tcn_forward.3} parent=11 // pred_check
          %p188 = pneg %p136
        $region26: #{tcn_forward.3} parent=11 // pred_check_branch
          %190 = sbr.rel (%p188) target = $region28
        $region27: #{tcn_forward.3} parent=11 // pred_region
          _
        $region28: #{tcn_forward.3} parent=11 // pred_fallthru
          _
      $region12: #{tcn_forward.3} parent=5 // pred_fallthru
        _
      %p191 = scmp.lt.s32.totalorder %s14, 2
      // Predicated region
      $region29: #{tcn_forward.3} parent=5 // pred_check
        %p192 = pneg %p191
      $region30: #{tcn_forward.3} parent=5 // pred_check_branch
        %194 = sbr.rel (%p192) target = $region32
      $region31: #{tcn_forward.3} parent=5 // pred_region
        // Predicated region
        $region33: #{tcn_forward.3} parent=31 // pred_check
          %p195 = pneg %p46
        $region34: #{tcn_forward.3} parent=31 // pred_check_branch
          %197 = sbr.rel (%p195) target = $region36
        $region35: #{tcn_forward.3} parent=31 // pred_region
          %p198 = scmp.lt.s32.totalorder %s22, 1
          %s199 = scalar_select %p198, %s22, 1
          %s200 = smul.addr %s199, 8
          %s201 = scalar_lea.vmem %s0, %s200
        $region36: #{tcn_forward.3} parent=31 // pred_fallthru
          _
      $region32: #{tcn_forward.3} parent=5 // pred_fallthru
        _
      %p202 = scmp.le.s32.totalorder 1, %s14
      %p203 = scmp.lt.s32.totalorder %s14, 3
      %p204 = pnand %p202, %p203
      %p205 = pneg %p204
      // Predicated region
      $region37: #{tcn_forward.3} parent=5 // pred_check
        _
      $region38: #{tcn_forward.3} parent=5 // pred_check_branch
        %207 = sbr.rel (%p204) target = $region40
      $region39: #{tcn_forward.3} parent=5 // pred_region
        %s208 = ssub.s32 %s14, 1
        %p209 = scmp.lt.s32.totalorder %s24, 1
        %s210 = scalar_select %p209, %s24, 1
        %s211 = smul.addr %s210, 8
        %s212 = scalar_lea.vmem %s0, %s211
        %p213 = pneg %p52
        %p214 = pneg %p49
        %p215 = pneg %p73
        %p216 = pneg %p70
        %p217 = pneg %p94
        %p218 = pneg %p91
        %p219 = pneg %p115
        %p220 = pneg %p112
        %p221 = pneg %p136
        %p222 = pneg %p133
        %p223 = pneg %p164
        %p224 = pneg %p161
        %s225 = sand.u32 %s151, 1
        %s226 = scalar_lea.sflag [#allocation3], %s225
        %s227 = sand.u32 %s151, 1
        %s228 = smul.addr %s227, 8
        %s229 = scalar_lea.vmem [#allocation2], %s228
        %p230 = scmp.lt.s32.totalorder %s24, 1
        %s231 = scalar_select %p230, %s24, 1
        %s232 = smul.addr %s231, 8
        %s233 = scalar_lea.vmem %s0, %s232
        %v234 = vld [vmem:[%s233] sm:$0xff]
        %236 = vrot.lane.b32.xlu0 %v234, 126
        %v237 = vpop.permute.xlu0 %236
        %v239 = vld [vmem:[%s1] sm:$0xff]
        %v240 = vld [vmem:[%s2] sm:$0xff]
        %242 = vset.pattern.permute.xlu0 0
        %243 = vperm.xlu0 %242, %v240
        %v244 = vpop.permute.xlu0 %243
        %vm246 = vcmask 130048
        %v248 = vsel %vm246, %v239, 0
        %250 = vmatprep.subr.mxu0 0.0
        %251 = vmatpush1.msra.mxu0 0.0
        %252 = vmatprep.subr.mxu0 0.0
        %253 = vmatpush1.msra.mxu0 0.0
        %254 = vmatprep.subr.mxu0 0.0
        %255 = vmatpush1.msra.mxu0 0.0
        %256 = vmatprep.subr.mxu0 0.0
        %257 = vmatpush1.msra.mxu0 0.0
        %258 = vmatprep.subr.mxu0 0.0
        %259 = vmatpush1.msra.mxu0 0.0
        %260 = vmatprep.subr.mxu0 0.0
        %261 = vmatpush1.msra.mxu0 0.0
        %262 = vmatprep.subr.mxu0 0.0
        %263 = vmatpush1.msra.mxu0 0.0
        %264 = vmatprep.subr.mxu0 0.0
        %265 = vmatpush1.msra.mxu0 0.0
        %266 = vmatprep.subr.mxu0 0.0
        %267 = vmatpush1.msra.mxu0 0.0
        %268 = vmatprep.subr.mxu0 0.0
        %269 = vmatpush1.msra.mxu0 0.0
        %270 = vmatprep.subr.mxu0 0.0
        %271 = vmatpush1.msra.mxu0 0.0
        %272 = vmatprep.subr.mxu0 0.0
        %273 = vmatpush1.msra.mxu0 0.0
        %274 = vmatprep.subr.mxu0 0.0
        %275 = vmatpush1.msra.mxu0 0.0
        %276 = vmatprep.subr.mxu0 0.0
        %277 = vmatpush1.msra.mxu0 0.0
        %278 = vmatprep.subr.mxu0 0.0
        %279 = vmatpush1.msra.mxu0 %v237
        %280 = vmatprep.subr.mxu0 0.0
        %281 = vmatpush1.msra.mxu0 %v234
        %282 = vmatprep.subr.mxu0 0.0
        %283 = vmatpush2.msra.mxu0 0.0
        %284 = vmatprep.subr.mxu0 0.0
        %285 = vmatpush2.msra.mxu0 0.0
        %286 = vmatprep.subr.mxu0 0.0
        %287 = vmatpush2.msra.mxu0 0.0
        %288 = vmatprep.subr.mxu0 0.0
        %289 = vmatpush2.msra.mxu0 0.0
        %290 = vmatprep.subr.mxu0 0.0
        %291 = vmatpush2.msra.mxu0 0.0
        %292 = vmatprep.subr.mxu0 0.0
        %293 = vmatpush2.msra.mxu0 0.0
        %294 = vmatprep.subr.mxu0 0.0
        %295 = vmatpush2.msra.mxu0 0.0
        %296 = vmatprep.subr.mxu0 0.0
        %297 = vmatpush2.msra.mxu0 0.0
        %298 = vmatprep.subr.mxu0 0.0
        %299 = vmatpush2.msra.mxu0 0.0
        %300 = vmatprep.subr.mxu0 0.0
        %301 = vmatpush2.msra.mxu0 0.0
        %302 = vmatprep.subr.mxu0 0.0
        %303 = vmatpush2.msra.mxu0 0.0
        %304 = vmatprep.subr.mxu0 0.0
        %305 = vmatpush2.msra.mxu0 0.0
        %306 = vmatprep.subr.mxu0 0.0
        %307 = vmatpush2.msra.mxu0 0.0
        %308 = vmatprep.subr.mxu0 0.0
        %309 = vmatpush2.msra.mxu0 0.0
        %310 = vmatprep.subr.mxu0 0.0
        %311 = vmatpush2.msra.mxu0 0.0
        %312 = vmatprep.subr.mxu0 0.0
        %313 = vmatpush2.msra.mxu0 0.0
        %314 = vmatprep.mubr.f32.mxu0 0.0
        %315 = vmatmul.mubr.f32.gmra.mxu0 %v248
        %v316 = vpop.f32.mrf.mxu0
        %v317 = vadd.f32 %v244, %v316
        %v318 = vpop.f32.mrf.mxu0
        %319 = vdwg.mxu0
        %v320 = vmax.f32 %v317, 0.0
        %v321 = vlaneseq
        %v322 = vand.u32 %v321, 127
        %s323 = smul.u32 %s23, 16
        %s324 = ssub.s32 %s323, 2
        %v325 = vstv %s324
        %v326 = vadd.s32 %v325, %v322
        %vm327 = vcmp.ge.s32.totalorder %v326, 0
        %v328 = vsel %vm327, 1, 0
        %vm329 = vcmp.eq.s32.totalorder %v328, 1
        %v330 = vsel %vm329, %v320, 0.0
        %332 = vrot.lane.b32.xlu0 %v330, 126
        %v333 = vpop.permute.xlu0 %332
        %v335 = vld [vmem:[%s3] sm:$0xff]
        %v336 = vld [vmem:[%s4] sm:$0xff]
        %338 = vset.pattern.permute.xlu0 0
        %339 = vperm.xlu0 %338, %v336
        %v340 = vpop.permute.xlu0 %339
        %v343 = vsel %vm246, %v335, 0
        %345 = vmatprep.subr.mxu0 0.0
        %346 = vmatpush1.msra.mxu0 0.0
        %347 = vmatprep.subr.mxu0 0.0
        %348 = vmatpush1.msra.mxu0 0.0
        %349 = vmatprep.subr.mxu0 0.0
        %350 = vmatpush1.msra.mxu0 0.0
        %351 = vmatprep.subr.mxu0 0.0
        %352 = vmatpush1.msra.mxu0 0.0
        %353 = vmatprep.subr.mxu0 0.0
        %354 = vmatpush1.msra.mxu0 0.0
        %355 = vmatprep.subr.mxu0 0.0
        %356 = vmatpush1.msra.mxu0 0.0
        %357 = vmatprep.subr.mxu0 0.0
        %358 = vmatpush1.msra.mxu0 0.0
        %359 = vmatprep.subr.mxu0 0.0
        %360 = vmatpush1.msra.mxu0 0.0
        %361 = vmatprep.subr.mxu0 0.0
        %362 = vmatpush1.msra.mxu0 0.0
        %363 = vmatprep.subr.mxu0 0.0
        %364 = vmatpush1.msra.mxu0 0.0
        %365 = vmatprep.subr.mxu0 0.0
        %366 = vmatpush1.msra.mxu0 0.0
        %367 = vmatprep.subr.mxu0 0.0
        %368 = vmatpush1.msra.mxu0 0.0
        %369 = vmatprep.subr.mxu0 0.0
        %370 = vmatpush1.msra.mxu0 0.0
        %371 = vmatprep.subr.mxu0 0.0
        %372 = vmatpush1.msra.mxu0 0.0
        %373 = vmatprep.subr.mxu0 0.0
        %374 = vmatpush1.msra.mxu0 %v333
        %375 = vmatprep.subr.mxu0 0.0
        %376 = vmatpush1.msra.mxu0 %v330
        %377 = vmatprep.subr.mxu0 0.0
        %378 = vmatpush2.msra.mxu0 0.0
        %379 = vmatprep.subr.mxu0 0.0
        %380 = vmatpush2.msra.mxu0 0.0
        %381 = vmatprep.subr.mxu0 0.0
        %382 = vmatpush2.msra.mxu0 0.0
        %383 = vmatprep.subr.mxu0 0.0
        %384 = vmatpush2.msra.mxu0 0.0
        %385 = vmatprep.subr.mxu0 0.0
        %386 = vmatpush2.msra.mxu0 0.0
        %387 = vmatprep.subr.mxu0 0.0
        %388 = vmatpush2.msra.mxu0 0.0
        %389 = vmatprep.subr.mxu0 0.0
        %390 = vmatpush2.msra.mxu0 0.0
        %391 = vmatprep.subr.mxu0 0.0
        %392 = vmatpush2.msra.mxu0 0.0
        %393 = vmatprep.subr.mxu0 0.0
        %394 = vmatpush2.msra.mxu0 0.0
        %395 = vmatprep.subr.mxu0 0.0
        %396 = vmatpush2.msra.mxu0 0.0
        %397 = vmatprep.subr.mxu0 0.0
        %398 = vmatpush2.msra.mxu0 0.0
        %399 = vmatprep.subr.mxu0 0.0
        %400 = vmatpush2.msra.mxu0 0.0
        %401 = vmatprep.subr.mxu0 0.0
        %402 = vmatpush2.msra.mxu0 0.0
        %403 = vmatprep.subr.mxu0 0.0
        %404 = vmatpush2.msra.mxu0 0.0
        %405 = vmatprep.subr.mxu0 0.0
        %406 = vmatpush2.msra.mxu0 0.0
        %407 = vmatprep.subr.mxu0 0.0
        %408 = vmatpush2.msra.mxu0 0.0
        %409 = vmatprep.mubr.f32.mxu0 0.0
        %410 = vmatmul.mubr.f32.gmra.mxu0 %v343
        %v411 = vpop.f32.mrf.mxu0
        %v412 = vadd.f32 %v340, %v411
        %v413 = vpop.f32.mrf.mxu0
        %414 = vdwg.mxu0
        %v415 = vmax.f32 %v412, 0.0
        %416 = vrot.lane.b32.xlu0 %v234, 124
        %v417 = vpop.permute.xlu0 %416
        %v419 = vadd.f32 %v415, %v417
        %v420 = vmax.f32 %v419, 0.0
        %421 = vst.msk [vmem:[%s229] sm:$0xff] %vm246, %v420
        %s422 = sand.u32 %s151, 1
        %s423 = scalar_lea.sflag [#allocation3], %s422
        %s424 = sand.u32 %s151, 1
        %s425 = smul.addr %s424, 8
        %s426 = scalar_lea.vmem [#allocation2], %s425
        // Predicated region
        $region41: #{tcn_forward.3} parent=39 // pred_check
          %p427 = pneg %p161
        $region42: #{tcn_forward.3} parent=39 // pred_check_branch
          %429 = sbr.rel (%p427) target = $region44
        $region43: #{tcn_forward.3} parent=39 // pred_region
          %s431 = ssub.s32 128, 128
          %432 = vsyncadd %s423, %s431
          %s433 = sadd.s32 %s23, %s24
          %s434 = smul.addr %s433, 128
          %s435 = scalar_lea.hbm %s5, %s434
          %s437 = sshll.u32 %s426, 4
          %s438 = int_to_ptr.vmem [resolvable:$true] %s437
          %440 = dma.vmem_to_hbm [thread:$0]  %s438, 128, %s435, %s423
        $region44: #{tcn_forward.3} parent=39 // pred_fallthru
          _
      $region40: #{tcn_forward.3} parent=5 // pred_fallthru
        _
      %p441 = scmp.le.s32.totalorder 2, %s14
      // Predicated region
      $region45: #{tcn_forward.3} parent=5 // pred_check
        %p442 = pneg %p441
      $region46: #{tcn_forward.3} parent=5 // pred_check_branch
        %444 = sbr.rel (%p442) target = $region48
      $region47: #{tcn_forward.3} parent=5 // pred_region
        %s445 = ssub.s32 %s14, 2
        // Predicated region
        $region49: #{tcn_forward.3} parent=47 // pred_check
          %p446 = pneg %p167
        $region50: #{tcn_forward.3} parent=47 // pred_check_branch
          %448 = sbr.rel (%p446) target = $region52
        $region51: #{tcn_forward.3} parent=47 // pred_region
          %s449 = sand.u32 %s152, 1
          %s450 = scalar_lea.sflag [#allocation3], %s449
          %s451 = sand.u32 %s152, 1
          %s452 = smul.addr %s451, 8
          %s453 = scalar_lea.vmem [#allocation2], %s452
          %454 = dma.done %s450, 128
        $region52: #{tcn_forward.3} parent=47 // pred_fallthru
          _
      $region48: #{tcn_forward.3} parent=5 // pred_fallthru
        _
    $region6: #{tcn_forward.3} parent=1 // loop_footer
      %s18 = sadd.s32 1, %s14
    $region7: #{tcn_forward.3} parent=1 // loop_footer_branch
      %13 = sbr.rel target = $region3
    $region8: #{tcn_forward.3} parent=1 // loop_exit
      _
    %455 = vsyncpa [#allocation3], 1
    %s456 = scalar_lea.sflag [#allocation3], 1
    %457 = vsyncpa %s456, 1

</llo_original>
